<compile_context>
chip_gen: v6e
topology: v6e:2x2x1
jax: 0.10.0
libtpu: 0.0.40
codegen_flags: <defaults>
</compile_context>

<pallas_src>
import functools

import jax
import jax.numpy as jnp
from jax.experimental import pallas as pl
from jax.experimental.pallas import tpu as pltpu


def _round_up(x: int, m: int) -> int:
    return ((x + m - 1) // m) * m


def _chip_profile():
    """Per-generation tiling/VMEM profile (conservative on unknown chips)."""
    kind = ""
    try:
        kind = jax.devices()[0].device_kind.lower()
    except Exception:
        pass
    if "v7" in kind:
        # 2 TensorCores, 64 MiB VMEM per core: smaller input budget, leave headroom
        # for f32 intermediates under a 32 MiB scoped limit.
        return dict(cores=2, vmem_limit=32 << 20, tile_budget=10 << 20, tb_cap=2048)
    if any(t in kind for t in ("v6", "v5", "v4")):
        # 1 TC, 128 MiB VMEM: fewer, larger DMAs amortize per-grid-step overhead.
        return dict(cores=1, vmem_limit=64 << 20, tile_budget=32 << 20, tb_cap=4096)
    # Unknown / older parts: same budget the previously-validated version used.
    return dict(cores=1, vmem_limit=32 << 20, tile_budget=12 << 20, tb_cap=1024)


# -----------------------------------------------------------------------------
# (A) Contrastive loss kernel
# -----------------------------------------------------------------------------
def _contrastive_loss_kernel(anchor_ref, other_ref, w_ref, out_ref, acc_ref,
                             *, margin: float):
    i = pl.program_id(1)          # batch-tile id (reduction axis)
    nb = pl.num_programs(1)

    @pl.when(i == 0)
    def _init():
        acc_ref[...] = jnp.zeros_like(acc_ref)

    # Load in native dtype (bf16 OK); upcast to f32 BEFORE the subtraction so
    # nearly-equal embeddings don't lose precision.
    a = anchor_ref[...].astype(jnp.float32)                 # (tb, D)
    b = other_ref[...].astype(jnp.float32)                  # (tb, D)
    diff = a - b + 1e-6                                     # eps matches F.pairwise_distance
    d2 = jnp.sum(diff * diff, axis=-1, keepdims=True)       # (tb, 1)  lane reduce (XLU)
    d = jnp.sqrt(d2)
    hinge = jnp.maximum(margin - d, 0.0)

    # Per-row weights precomputed in the wrapper:
    #   w[:,0] = 0.5 * label * valid ; w[:,1] = 0.5 * (1-label) * valid
    # (padding mask already folded in -> no in-kernel iota/select)
    w = w_ref[...]                                          # (tb, 2) f32
    w_pos = w[:, 0:1]
    w_neg = w[:, 1:2]

    # Elementwise VMEM vector accumulation (no per-step cross-sublane reduce,
    # no SMEM scalar read-modify-write).
    acc_ref[...] += w_pos * d2 + w_neg * (hinge * hinge)

    @pl.when(i == nb - 1)
    def _finalize():
        total = jnp.sum(acc_ref[...])
        # Fully (8,128)-aligned per-partial output block; wrapper reads [:, 0, 0].
        out_ref[...] = jnp.full(out_ref.shape, total, dtype=jnp.float32)


def _pick_block_rows(batch: int, feat: int, itemsize: int, num_partials: int,
                     tile_budget: int, tb_cap: int) -> int:
    # bf16 embeddings pack 16 rows per sublane tile; f32 packs 8.
    row_align = max(8, 32 // max(itemsize, 1))
    # Per-row VMEM bytes:
    #   inputs:        2 arrays x 2 pipeline buffers x D x itemsize
    #   f32 interm.:   ~3 f32 copies of the tile (upcast a, b/diff, diff^2)
    #   weights tile:  (tb,2) f32 lane-padded to 128, double-buffered
    #   accumulator:   (tb,1) f32 lane-padded to 128
    bytes_per_row = 4 * feat * itemsize + 12 * feat + 3 * 128 * 4
    tb = tile_budget // max(bytes_per_row, 1)
    tb = max(row_align, (tb // row_align) * row_align)
    tb = min(tb, tb_cap)
    per_partial = -(-batch // num_partials)
    tb = min(tb, _round_up(max(per_partial, 1), row_align))
    return tb


def contrastive_loss(rep_anchor, rep_other, labels,
                     margin: float = 0.5, size_average: bool = True,
                     num_partials: int | None = None):
    """rep_anchor / rep_other: (B, D) in native dtype (f32 or bf16); labels: (B,)."""
    B, D = rep_anchor.shape
    itemsize = jnp.dtype(rep_anchor.dtype).itemsize
    prof = _chip_profile()
    if num_partials is None:
        num_partials = prof["cores"]

    tb = _pick_block_rows(B, D, itemsize, num_partials,
                          prof["tile_budget"], prof["tb_cap"])
    n_blocks = -(-B // tb)
    nb = max(1, -(-n_blocks // num_partials))
    b_pad = num_partials * nb * tb

    # Precompute per-row weights (0.5 and padding mask folded in).
    lab = labels.astype(jnp.float32).reshape(B, 1)
    weights = jnp.concatenate([0.5 * lab, 0.5 * (1.0 - lab)], axis=-1)   # (B, 2)
    if b_pad != B:
        pad = b_pad - B
        rep_anchor = jnp.pad(rep_anchor, ((0, pad), (0, 0)))
        rep_other = jnp.pad(rep_other, ((0, pad), (0, 0)))
        weights = jnp.pad(weights, ((0, pad), (0, 0)))   # padded rows -> zero weight

    kernel = functools.partial(_contrastive_loss_kernel, margin=float(margin))
    row_map = lambda p, i: (p * nb + i, 0)

    cost = pl.CostEstimate(
        flops=B * (4 * D + 12),
        transcendentals=B,
        bytes_accessed=2 * b_pad * D * itemsize + b_pad * 8
                       + num_partials * 8 * 128 * 4,
    )

    def _call(first_sem):
        return pl.pallas_call(
            kernel,
            out_shape=jax.ShapeDtypeStruct((num_partials, 8, 128), jnp.float32),
            grid_spec=pltpu.PrefetchScalarGridSpec(
                num_scalar_prefetch=0,
                grid=(num_partials, nb),
                in_specs=[
                    pl.BlockSpec((tb, D), row_map),   # anchor tile (native dtype)
                    pl.BlockSpec((tb, D), row_map),   # other tile  (native dtype)
                    pl.BlockSpec((tb, 2), row_map),   # per-row loss weights (f32)
                ],
                out_specs=pl.BlockSpec((1, 8, 128), lambda p, i: (p, 0, 0)),
                scratch_shapes=[pltpu.VMEM((tb, 1), jnp.float32)],
            ),
            compiler_params=pltpu.CompilerParams(
                dimension_semantics=(first_sem, "arbitrary"),
                vmem_limit_bytes=prof["vmem_limit"],
            ),
            cost_estimate=cost,
        )(rep_anchor, rep_other, weights)

    partials = None
    if num_partials > 1:
        core_par = getattr(pltpu, "CORE_PARALLEL", None)
        if core_par is not None:
            try:
                # Real cross-TensorCore sharding of the partial axis (v7x).
                partials = _call(core_par)
            except Exception:
                partials = None
        if partials is None:
            partials = _call("parallel")
    else:
        partials = _call("arbitrary")

    total = jnp.sum(partials[:, 0, 0])
    return total / B if size_average else total


# -----------------------------------------------------------------------------
# (B) `Model` mode==0 comparison head (fc1 -> batchnorm(eval) -> relu -> fc2 -> sigmoid)
# -----------------------------------------------------------------------------
def _pair_head_mode0_kernel(e1_ref, e2_ref, w1a_ref, w1b_ref, scale_ref, shift_ref,
                            w2_ref, b2_ref, out_ref):
    e1 = e1_ref[...].astype(jnp.float32)                    # (B, E)
    e2 = e2_ref[...].astype(jnp.float32)
    x1 = e1 * e1 + e2 * e2                                  # emb1^2 + emb2^2
    diff = e1 - e2
    x2 = diff * diff                                        # (emb1 - emb2)^2
    # fc1 on the concatenated features, done as two matmuls to avoid a lane concat:
    # [x1, x2] @ W1 == x1 @ W1[:E] + x2 @ W1[E:]
    h = jnp.dot(x1, w1a_ref[...], preferred_element_type=jnp.float32)
    h = h + jnp.dot(x2, w1b_ref[...], preferred_element_type=jnp.float32)
    # batchnorm (inference) + fc1 bias folded into scale/shift by the wrapper
    h = h * scale_ref[...] + shift_ref[...]
    h = jnp.maximum(h, 0.0)                                 # relu
    # fc2 (H -> 1) as a lane reduce against the weight row
    logit = jnp.sum(h * w2_ref[...], axis=-1, keepdims=True) + b2_ref[...]
    out_ref[...] = (1.0 / (1.0 + jnp.exp(-logit))).astype(out_ref.dtype)


def model_mode0_head(emb1, emb2, w1, b1, gamma, beta, running_mean, running_var,
                     w2, b2, eps: float = 1e-3):
    """Mode-0 head of `Model`. Weights use JAX convention: w1 (2E, H), w2 (H, 1)."""
    B, E = emb1.shape
    inv_std = gamma / jnp.sqrt(running_var + eps)
    scale = inv_std.reshape(1, -1).astype(jnp.float32)
    shift = (beta + (b1 - running_mean) * inv_std).reshape(1, -1).astype(jnp.float32)
    w1a = w1[:E, :].astype(jnp.float32)
    w1b = w1[E:, :].astype(jnp.float32)
    w2row = w2.reshape(1, -1).astype(jnp.float32)
    b2s = jnp.asarray(b2, jnp.float32).reshape(1, 1)
    return pl.pallas_call(
        _pair_head_mode0_kernel,
        out_shape=jax.ShapeDtypeStruct((B, 1), jnp.float32),
    )(emb1, emb2, w1a, w1b, scale, shift, w2row, b2s)


# -----------------------------------------------------------------------------
# Pure-JAX references
# -----------------------------------------------------------------------------
def _loss_reference(rep_anchor, rep_other, labels, margin=0.5, size_average=True):
    diff = rep_anchor - rep_other + 1e-6
    d = jnp.sqrt(jnp.sum(diff * diff, axis=-1))
    lab = labels.astype(jnp.float32)
    losses = 0.5 * (lab * d ** 2 + (1 - lab) * jnp.maximum(margin - d, 0.0) ** 2)
    return jnp.mean(losses) if size_average else jnp.sum(losses)


def _head_reference(e1, e2, w1, b1, gamma, beta, mean, var, w2, b2, eps=1e-3):
    x1 = e1 ** 2 + e2 ** 2
    x2 = (e1 - e2) ** 2
    feats = jnp.concatenate([x1, x2], axis=-1)
    h = feats @ w1 + b1
    h = (h - mean) / jnp.sqrt(var + eps) * gamma + beta
    h = jnp.maximum(h, 0.0)
    logit = h @ w2 + b2
    return 1.0 / (1.0 + jnp.exp(-logit))


if __name__ == "__main__":
    key = jax.random.PRNGKey(0)
    ks = jax.random.split(key, 16)

    # ---- Contrastive loss: f32, tile-aligned batch -------------------------
    B, D = 16, 128
    ra = jax.random.normal(ks[0], (B, D), dtype=jnp.float32)
    ro = jax.random.normal(ks[1], (B, D), dtype=jnp.float32)
    lb = jax.random.bernoulli(ks[2], p=0.5, shape=(B,)).astype(jnp.int32)
    loss = jax.block_until_ready(contrastive_loss(ra, ro, lb))
    ref = _loss_reference(ra, ro, lb)
    assert jnp.allclose(loss, ref, rtol=1e-5, atol=1e-6), (loss, ref)

    # ---- Contrastive loss: non-multiple-of-tile batch (padding + masking) --
    B2, D2 = 13, 96
    ra2 = jax.random.normal(ks[3], (B2, D2), dtype=jnp.float32)
    ro2 = jax.random.normal(ks[4], (B2, D2), dtype=jnp.float32)
    lb2 = jax.random.bernoulli(ks[5], p=0.5, shape=(B2,)).astype(jnp.int32)
    loss2 = jax.block_until_ready(contrastive_loss(ra2, ro2, lb2))
    ref2 = _loss_reference(ra2, ro2, lb2)
    assert jnp.allclose(loss2, ref2, rtol=1e-5, atol=1e-6), (loss2, ref2)

    # ---- Contrastive loss: native bf16 inputs (f32 math inside the kernel) -
    a16, o16 = ra.astype(jnp.bfloat16), ro.astype(jnp.bfloat16)
    loss3 = jax.block_until_ready(contrastive_loss(a16, o16, lb))
    ref3 = _loss_reference(a16.astype(jnp.float32), o16.astype(jnp.float32), lb)
    assert jnp.allclose(loss3, ref3, rtol=1e-4, atol=1e-5), (loss3, ref3)

    # ---- Model mode-0 head on small embeddings ------------------------------
    # TODO(synk): the VGG backbone encoder producing these embeddings is not translated.
    Bh, E = 8, 128
    e1 = jax.random.normal(ks[6], (Bh, E), dtype=jnp.float32)
    e2 = jax.random.normal(ks[7], (Bh, E), dtype=jnp.float32)
    w1 = 0.05 * jax.random.normal(ks[8], (2 * E, E), dtype=jnp.float32)
    b1 = 0.05 * jax.random.normal(ks[9], (E,), dtype=jnp.float32)
    gamma = 1.0 + 0.1 * jax.random.normal(ks[10], (E,), dtype=jnp.float32)
    beta = 0.1 * jax.random.normal(ks[11], (E,), dtype=jnp.float32)
    rmean = 0.1 * jax.random.normal(ks[12], (E,), dtype=jnp.float32)
    rvar = 0.5 + jnp.abs(jax.random.normal(ks[13], (E,), dtype=jnp.float32)) * 0.5
    w2 = 0.1 * jax.random.normal(ks[14], (E, 1), dtype=jnp.float32)
    b2 = 0.1 * jax.random.normal(ks[15], (1,), dtype=jnp.float32)

    probs = jax.block_until_ready(
        model_mode0_head(e1, e2, w1, b1, gamma, beta, rmean, rvar, w2, b2))
    probs_ref = _head_reference(e1, e2, w1, b1, gamma, beta, rmean, rvar, w2, b2)
    assert probs.shape == (Bh, 1)
    assert jnp.allclose(probs, probs_ref, rtol=5e-3, atol=5e-3), (probs, probs_ref)

    print("KERNEL_OK")
</pallas_src>

<mosaic_0001>
module attributes {stable_mosaic.version = 11 : i64} {
  func.func @_contrastive_loss_kernel(%arg0: i32, %arg1: i32, %arg2: memref<16x128xf32, #tpu.memory_space<vmem>>, %arg3: memref<16x128xf32, #tpu.memory_space<vmem>>, %arg4: memref<16x2xf32, #tpu.memory_space<vmem>>, %arg5: memref<1x8x128xf32, #tpu.memory_space<vmem>>, %arg6: memref<16x1xf32, #tpu.memory_space<vmem>>) attributes {dimension_semantics = [#tpu.dimension_semantics<arbitrary>, #tpu.dimension_semantics<arbitrary>], iteration_bounds = array<i64: 1, 1>, scalar_prefetch = 0 : i64, scratch_operands = 1 : i64, tpu.core_type = #tpu.core_type<tc>, window_params = [{transform_indices = @transform_0, window_bounds = array<i64: 16, 128>}, {transform_indices = @transform_1, window_bounds = array<i64: 16, 128>}, {transform_indices = @transform_2, window_bounds = array<i64: 16, 2>}, {transform_indices = @transform_3, window_bounds = array<i64: 1, 8, 128>}]} {
    %c0_i32 = arith.constant 0 : i32
    %0 = arith.cmpi eq, %arg1, %c0_i32 : i32
    %1 = arith.extui %0 : i1 to i32
    %c0_i32_0 = arith.constant 0 : i32
    %2 = arith.cmpi ne, %1, %c0_i32_0 : i32
    scf.if %2 {
      %cst_15 = arith.constant 0.000000e+00 : f32
      %29 = vector.broadcast %cst_15 : f32 to vector<16x1xf32>
      %c0_16 = arith.constant 0 : index
      %c0_17 = arith.constant 0 : index
      %30 = vector.load %arg6[%c0_16, %c0_17] : memref<16x1xf32, #tpu.memory_space<vmem>>, vector<16x1xf32>
      tpu.vector_store %arg6[%c0_16, %c0_17], %29 {strides = array<i32>} : memref<16x1xf32, #tpu.memory_space<vmem>>, vector<16x1xf32>,
    } else {
    }
    %c0 = arith.constant 0 : index
    %c0_1 = arith.constant 0 : index
    %3 = vector.load %arg2[%c0, %c0_1] : memref<16x128xf32, #tpu.memory_space<vmem>>, vector<16x128xf32>
    %c0_2 = arith.constant 0 : index
    %c0_3 = arith.constant 0 : index
    %4 = vector.load %arg3[%c0_2, %c0_3] : memref<16x128xf32, #tpu.memory_space<vmem>>, vector<16x128xf32>
    %5 = arith.subf %3, %4 : vector<16x128xf32>
    %cst = arith.constant 9.99999997E-7 : f32
    %6 = vector.broadcast %cst : f32 to vector<16x128xf32>
    %7 = arith.addf %5, %6 : vector<16x128xf32>
    %8 = arith.mulf %7, %7 : vector<16x128xf32>
    %cst_4 = arith.constant dense<0.000000e+00> : vector<16xf32>
    %9 = vector.multi_reduction <add>, %8, %cst_4 [1] : vector<16x128xf32> to vector<16xf32>
    %10 = vector.shape_cast %9 : vector<16xf32> to vector<16x1xf32>
    %11 = math.sqrt %10 : vector<16x1xf32>
    %cst_5 = arith.constant 5.000000e-01 : f32
    %12 = vector.broadcast %cst_5 : f32 to vector<16x1xf32>
    %13 = arith.subf %12, %11 : vector<16x1xf32>
    %cst_6 = arith.constant 0.000000e+00 : f32
    %14 = vector.broadcast %cst_6 : f32 to vector<16x1xf32>
    %15 = arith.maximumf %13, %14 : vector<16x1xf32>
    %c0_7 = arith.constant 0 : index
    %c0_8 = arith.constant 0 : index
    %16 = vector.load %arg4[%c0_7, %c0_8] : memref<16x2xf32, #tpu.memory_space<vmem>>, vector<16x2xf32>
    %17 = vector.extract_strided_slice %16 {offsets = [0, 0], sizes = [16, 1], strides = [1, 1]} : vector<16x2xf32> to vector<16x1xf32>
    %18 = vector.extract_strided_slice %16 {offsets = [0, 1], sizes = [16, 1], strides = [1, 1]} : vector<16x2xf32> to vector<16x1xf32>
    %c0_9 = arith.constant 0 : index
    %c0_10 = arith.constant 0 : index
    %19 = vector.load %arg6[%c0_9, %c0_10] : memref<16x1xf32, #tpu.memory_space<vmem>>, vector<16x1xf32>
    %20 = arith.mulf %17, %10 : vector<16x1xf32>
    %21 = arith.mulf %15, %15 : vector<16x1xf32>
    %22 = arith.mulf %18, %21 : vector<16x1xf32>
    %23 = arith.addf %20, %22 : vector<16x1xf32>
    %24 = arith.addf %19, %23 : vector<16x1xf32>
    %c0_11 = arith.constant 0 : index
    %c0_12 = arith.constant 0 : index
    %25 = vector.load %arg6[%c0_11, %c0_12] : memref<16x1xf32, #tpu.memory_space<vmem>>, vector<16x1xf32>
    tpu.vector_store %arg6[%c0_11, %c0_12], %24 {strides = array<i32>} : memref<16x1xf32, #tpu.memory_space<vmem>>, vector<16x1xf32>,
    %c0_i32_13 = arith.constant 0 : i32
    %26 = arith.cmpi eq, %arg1, %c0_i32_13 : i32
    %27 = arith.extui %26 : i1 to i32
    %c0_i32_14 = arith.constant 0 : i32
    %28 = arith.cmpi ne, %27, %c0_i32_14 : i32
    scf.if %28 {
      %c0_15 = arith.constant 0 : index
      %c0_16 = arith.constant 0 : index
      %29 = vector.load %arg6[%c0_15, %c0_16] : memref<16x1xf32, #tpu.memory_space<vmem>>, vector<16x1xf32>
      %30 = vector.shape_cast %29 : vector<16x1xf32> to vector<1x16x1xf32>
      %cst_17 = arith.constant dense<0.000000e+00> : vector<1xf32>
      %31 = vector.multi_reduction <add>, %30, %cst_17 [1, 2] : vector<1x16x1xf32> to vector<1xf32>
      %32 = vector.shape_cast %31 : vector<1xf32> to vector<1x1x1xf32>
      %33 = vector.extract %32[0, 0, 0] : f32 from vector<1x1x1xf32>
      %34 = vector.broadcast %33 : f32 to vector<1x8x128xf32>
      %c0_18 = arith.constant 0 : index
      %c0_19 = arith.constant 0 : index
      %c0_20 = arith.constant 0 : index
      %35 = vector.load %arg5[%c0_18, %c0_19, %c0_20] : memref<1x8x128xf32, #tpu.memory_space<vmem>>, vector<1x8x128xf32>
      tpu.vector_store %arg5[%c0_18, %c0_19, %c0_20], %34 {strides = array<i32>} : memref<1x8x128xf32, #tpu.memory_space<vmem>>, vector<1x8x128xf32>,
    } else {
    }
    return
  }
  func.func @transform_0(%arg0: i32, %arg1: i32) -> (i32, i32) {
    %c1_i32 = arith.constant 1 : i32
    %0 = arith.muli %arg0, %c1_i32 : i32
    %1 = arith.addi %0, %arg1 : i32
    %c0_i32 = arith.constant 0 : i32
    %c0_i32_0 = arith.constant 0 : i32
    return %1, %c0_i32 : i32, i32
  }
  func.func @transform_1(%arg0: i32, %arg1: i32) -> (i32, i32) {
    %c1_i32 = arith.constant 1 : i32
    %0 = arith.muli %arg0, %c1_i32 : i32
    %1 = arith.addi %0, %arg1 : i32
    %c0_i32 = arith.constant 0 : i32
    %c0_i32_0 = arith.constant 0 : i32
    return %1, %c0_i32 : i32, i32
  }
  func.func @transform_2(%arg0: i32, %arg1: i32) -> (i32, i32) {
    %c1_i32 = arith.constant 1 : i32
    %0 = arith.muli %arg0, %c1_i32 : i32
    %1 = arith.addi %0, %arg1 : i32
    %c0_i32 = arith.constant 0 : i32
    %c0_i32_0 = arith.constant 0 : i32
    return %1, %c0_i32 : i32, i32
  }
  func.func @transform_3(%arg0: i32, %arg1: i32) -> (i32, i32, i32) {
    %c0_i32 = arith.constant 0 : i32
    %c0_i32_0 = arith.constant 0 : i32
    %c0_i32_1 = arith.constant 0 : i32
    return %arg0, %c0_i32, %c0_i32_0 : i32, i32, i32
  }
}

</mosaic_0001>

<llo_original>
// kernel: tpu_custom_call.1
$region0: #{tpu_custom_call.1}
  #allocation0 [shape = 'u32[]', space=smem, size = 0x4, offset = 0x4, fixed_abs, tag = 'smem constant byte address 0x4 - core index']
  #allocation1 [shape = 'u32[144,128]{1,0:T(1,128)}', space=vmem, size = 0x12000, scoped, tag = 'internal scratch']
  #allocation2 [shape = 'f32[16,1]{1,0:T(8,128)}', space=vmem, size = 0x2000, scoped, tag = 'scratch operand']
  %s0 = inlined_call_operand.vmem [shape: f32[16,128], index: 0, kind: input, shape index: {}]
  %s1 = inlined_call_operand.hbm [shape: f32[16,128], index: 1, kind: input, shape index: {}]
  %s2 = inlined_call_operand.vmem [shape: f32[16,2], index: 2, kind: input, shape index: {}]
  %s3 = inlined_call_operand.hbm [shape: f32[1,8,128], index: 3, kind: output, shape index: {}]
  %s4 = sld [smem:[#allocation0]]
  $region34: #{tpu_custom_call.1} parent=0
    _
  %s6 = ssub.s32 1, %s4
  %s7 = scalar_select 0, %s6, %s4
  $region1: #{tpu_custom_call.1} parent=0
    #allocation3 [shape = 'u8[8192]{0}', space=vmem, size = 0x2000, scoped, tag = 'input window, operand 1, single buffered']
    #allocation4 [shape = 's32[1]{0}', space=sflag, size = 0x4, scoped, tag = 'scoped memory for tpu_custom_call.1']
    #allocation5 [shape = 's32[1]{0}', space=sflag, size = 0x4, scoped, tag = 'scoped memory for tpu_custom_call.1']
    #allocation6 [shape = 'u8[4096]{0}', space=vmem, size = 0x1000, scoped, tag = 'output window, operand 0, single buffered']
    %8 = vsyncpa [#allocation4], 0
    %9 = vsyncpa [#allocation5], 0
    // Predicated region
    $region2: #{tpu_custom_call.1} parent=1 // pred_check
      _
    $region3: #{tpu_custom_call.1} parent=1 // pred_check_branch
      %11 = sbr.rel (0) target = $region5
    $region4: #{tpu_custom_call.1} parent=1 // pred_region
      %s12 = sadd.s32 0, 0
      %s13 = smul.u32 2, %s12
      %p14 = scmp.lt.s32.totalorder %s13, 1
      %s15 = scalar_select %p14, %s13, 1
      %s16 = smul.addr %s15, 8
      %s17 = scalar_lea.vmem %s0, %s16
      %s18 = sadd.s32 0, 0
      %s19 = smul.u32 2, %s18
    $region5: #{tpu_custom_call.1} parent=1 // pred_fallthru
      _
    // Predicated region
    $region6: #{tpu_custom_call.1} parent=1 // pred_check
      _
    $region7: #{tpu_custom_call.1} parent=1 // pred_check_branch
      %21 = sbr.rel (0) target = $region9
    $region8: #{tpu_custom_call.1} parent=1 // pred_region
      %s22 = sadd.s32 0, 0
      %s23 = smul.u32 2, %s22
      %s25 = ssub.s32 256, 256
      %26 = vsyncadd [#allocation4], %s25
      %s27 = smul.addr %s23, 128
      %s28 = scalar_lea.hbm %s1, %s27
      %s29 = sshll.u32 [#allocation3], 4
      %s30 = int_to_ptr.vmem [resolvable:$true] %s29
      %35 = dma.hbm_to_vmem [thread:$0]  %s28, 256, %s30, [#allocation4], 128, 128, 8
    $region9: #{tpu_custom_call.1} parent=1 // pred_fallthru
      _
    // Predicated region
    $region10: #{tpu_custom_call.1} parent=1 // pred_check
      _
    $region11: #{tpu_custom_call.1} parent=1 // pred_check_branch
      %37 = sbr.rel (0) target = $region13
    $region12: #{tpu_custom_call.1} parent=1 // pred_region
      %s38 = sadd.s32 0, 0
      %s39 = smul.u32 2, %s38
      %p40 = scmp.lt.s32.totalorder %s39, 1
      %s41 = scalar_select %p40, %s39, 1
      %s42 = smul.addr %s41, 8
      %s43 = scalar_lea.vmem %s2, %s42
      %s44 = sadd.s32 0, 0
      %s45 = smul.u32 2, %s44
    $region13: #{tpu_custom_call.1} parent=1 // pred_fallthru
      _
    // Predicated region
    $region14: #{tpu_custom_call.1} parent=1 // pred_check
      _
    $region15: #{tpu_custom_call.1} parent=1 // pred_check_branch
      %47 = sbr.rel (0) target = $region17
    $region16: #{tpu_custom_call.1} parent=1 // pred_region
      %48 = dma.done [#allocation4], 256
    $region17: #{tpu_custom_call.1} parent=1 // pred_fallthru
      _
    %s49 = sadd.s32 0, 0
    %s50 = smul.u32 2, %s49
    %p51 = scmp.lt.s32.totalorder %s50, 1
    %s52 = scalar_select %p51, %s50, 1
    %s53 = smul.addr %s52, 8
    %s54 = scalar_lea.vmem %s0, %s53
    %s55 = sadd.s32 0, 0
    %s56 = smul.u32 2, %s55
    %p57 = scmp.lt.s32.totalorder %s56, 1
    %s58 = scalar_select %p57, %s56, 1
    %s59 = smul.addr %s58, 8
    %s60 = scalar_lea.vmem %s2, %s59
    %s61 = sadd.s32 0, 0
    %s62 = smul.u32 2, %s61
    %p63 = scmp.lt.s32.totalorder %s62, 1
    %s64 = scalar_select %p63, %s62, 1
    %s65 = smul.addr %s64, 8
    %s66 = scalar_lea.vmem %s0, %s65
    %s67 = sadd.s32 0, 0
    %s68 = smul.u32 2, %s67
    %s69 = sadd.s32 0, 0
    %s70 = smul.u32 2, %s69
    %s71 = sadd.s32 0, 0
    %s72 = smul.u32 2, %s71
    %p73 = scmp.lt.s32.totalorder %s72, 1
    %s74 = scalar_select %p73, %s72, 1
    %s75 = smul.addr %s74, 8
    %s76 = scalar_lea.vmem %s2, %s75
    %s77 = sadd.s32 0, 0
    %s78 = smul.u32 2, %s77
    %p79 = scmp.eq.s32.totalorder 0, 0
    // Predicated region
    $region18: #{tpu_custom_call.1} parent=1 // pred_check
      %p80 = pneg %p79
    $region19: #{tpu_custom_call.1} parent=1 // pred_check_branch
      %82 = sbr.rel (%p80) target = $region21
    $region20: #{tpu_custom_call.1} parent=1 // pred_region
      %vm83 = vcmask 7168
      %84 = vst.msk [vmem:[#allocation2] sm:$0xff] %vm83, 0.0
      %85 = vst.msk [vmem:[#allocation2 + $0x8] sm:$0xff] %vm83, 0.0
    $region21: #{tpu_custom_call.1} parent=1 // pred_fallthru
      _
    %v86 = vld [vmem:[%s66] sm:$0xff]
    %v87 = vld [vmem:[%s66 + $0x8] sm:$0xff]
    %v88 = vld [vmem:[#allocation3] sm:$0xff]
    %v89 = vld [vmem:[#allocation3 + $0x8] sm:$0xff]
    %v90 = vsub.f32 %v86, %v88
    %v91 = vsub.f32 %v87, %v89
    %v92 = vadd.f32 %v90, 1e-06
    %v93 = vadd.f32 %v91, 1e-06
    %v94 = vmul.f32 %v92, %v92
    %v95 = vmul.f32 %v93, %v93
    %96 = vadd.xlane.f32.xlu0 %v94
    %v97 = vpop.xlane.xlu0 %96
    %98 = vadd.xlane.f32.xlu0 %v95
    %v99 = vpop.xlane.xlu0 %98
    %v100 = vrsqrt.pop %v97
    %v101 = vmul.f32 %v97, %v100
    %vm102 = vcmp.eq.f32.partialorder %v97, inf
    %v103 = vsel %vm102, %v97, %v101
    %vm104 = vcmp.eq.f32.partialorder %v97, 0.0
    %v105 = vand.u32 %v97, 2147483648
    %v106 = vsel %vm104, %v105, %v103
    %v107 = vrsqrt.pop %v99
    %v108 = vmul.f32 %v99, %v107
    %vm109 = vcmp.eq.f32.partialorder %v99, inf
    %v110 = vsel %vm109, %v99, %v108
    %vm111 = vcmp.eq.f32.partialorder %v99, 0.0
    %v112 = vand.u32 %v99, 2147483648
    %v113 = vsel %vm111, %v112, %v110
    %v114 = vsub.f32 0.5, %v106
    %v115 = vsub.f32 0.5, %v113
    %v116 = vmax.f32 %v114, 0.0
    %v117 = vmax.f32 %v115, 0.0
    %v118 = vld [vmem:[%s76] sm:$0xff]
    %v119 = vld [vmem:[%s76 + $0x8] sm:$0xff]
    %v120 = vld [vmem:[#allocation2] sm:$0xff]
    %v121 = vld [vmem:[#allocation2 + $0x8] sm:$0xff]
    %v122 = vmul.f32 %v118, %v97
    %v123 = vmul.f32 %v119, %v99
    %v124 = vmul.f32 %v116, %v116
    %v125 = vmul.f32 %v117, %v117
    %v126 = vmul.f32 %v118, %v124
    %v127 = vmul.f32 %v119, %v125
    %130 = vrot.lane.b32.xlu0 %v126, 127
    %v131 = vpop.permute.xlu0 %130
    %132 = vrot.lane.b32.xlu0 %v127, 127
    %v133 = vpop.permute.xlu0 %132
    %v136 = vadd.f32 %v122, %v131
    %v137 = vadd.f32 %v123, %v133
    %v138 = vadd.f32 %v120, %v136
    %v139 = vadd.f32 %v121, %v137
    %vm140 = vcmask 7168
    %141 = vst.msk [vmem:[#allocation2] sm:$0xff] %vm140, %v138
    %142 = vst.msk [vmem:[#allocation2 + $0x8] sm:$0xff] %vm140, %v139
    // Predicated region
    $region22: #{tpu_custom_call.1} parent=1 // pred_check
      %p143 = pneg %p79
    $region23: #{tpu_custom_call.1} parent=1 // pred_check_branch
      %145 = sbr.rel (%p143) target = $region25
    $region24: #{tpu_custom_call.1} parent=1 // pred_region
      %v146 = vld [vmem:[#allocation2] sm:$0xff]
      %v147 = vld [vmem:[#allocation2 + $0x8] sm:$0xff]
      %v148 = vsel %vm140, %v146, 0.0
      %v149 = vsel %vm140, %v147, 0.0
      %v150 = vadd.f32 %v148, %v149
      %151 = vadd.xlane.f32.xlu0 %v150
      %v152 = vpop.xlane.xlu0 %151
      %v153 = vrot.slane %v152, 4
      %v154 = vadd.f32 %v152, %v153
      %v155 = vrot.slane %v154, 2
      %v156 = vadd.f32 %v154, %v155
      %v157 = vrot.slane %v156, 1
      %v158 = vadd.f32 %v156, %v157
      %s159 = vtos %v158
      %v160 = vstv %s159
      %161 = vst [vmem:[#allocation6] sm:$0xff] %v160
    $region25: #{tpu_custom_call.1} parent=1 // pred_fallthru
      _
    // Predicated region
    $region26: #{tpu_custom_call.1} parent=1 // pred_check
      _
    $region27: #{tpu_custom_call.1} parent=1 // pred_check_branch
      %163 = sbr.rel (0) target = $region29
    $region28: #{tpu_custom_call.1} parent=1 // pred_region
      %s165 = ssub.s32 128, 128
      %166 = vsyncadd [#allocation5], %s165
      %s168 = sshll.u32 [#allocation6], 4
      %s169 = int_to_ptr.vmem [resolvable:$true] %s168
      %171 = dma.vmem_to_hbm [thread:$0]  %s169, 128, %s3, [#allocation5]
    $region29: #{tpu_custom_call.1} parent=1 // pred_fallthru
      _
    // Predicated region
    $region30: #{tpu_custom_call.1} parent=1 // pred_check
      _
    $region31: #{tpu_custom_call.1} parent=1 // pred_check_branch
      %173 = sbr.rel (0) target = $region33
    $region32: #{tpu_custom_call.1} parent=1 // pred_region
      %174 = dma.done [#allocation5], 128
    $region33: #{tpu_custom_call.1} parent=1 // pred_fallthru
      _
    %175 = vsyncpa [#allocation4], 1
    %176 = vsyncpa [#allocation5], 1

</llo_original>
